<compile_context>
chip_gen: v5e
topology: v5e:2x2
jax: 0.10.0
libtpu: 0.0.40
codegen_flags: <defaults>
</compile_context>

<pallas_src>
import functools

import jax
import jax.numpy as jnp
from jax.experimental import pallas as pl
from jax.experimental.pallas import tpu as pltpu


# ---------------------------------------------------------------------------
# VMEM budget / tile pickers
# ---------------------------------------------------------------------------
def _vmem_capacity_bytes():
    try:
        info = pltpu.get_tpu_info()
        cap = getattr(info, "vmem_capacity_bytes", None)
        if cap:
            return int(cap)
    except Exception:
        pass
    return 64 * 1024 * 1024  # conservative (v7x per-TC VMEM)


_VMEM_CAP = _vmem_capacity_bytes()
_VMEM_LIMIT = max(32 * 1024 * 1024,
                  min(_VMEM_CAP, 128 * 1024 * 1024) - 16 * 1024 * 1024)
_TILE_BUDGET = int(_VMEM_LIMIT * 0.7)


def _round_up(x, m):
    return ((x + m - 1) // m) * m


def _pick_token_tile(total_rows, num_groups=1):
    """Token tile: MXU friendly, bounded by expected rows per group (avoids padding
    blow-up for small / imbalanced workloads), capped at 512."""
    per_group = max(16, -(-total_rows // max(num_groups, 1)))
    for c in (512, 256, 128, 64, 32, 16):
        if per_group >= c:
            return c
    return 16


def _swiglu_vmem_bytes(tm, d_dim, th, out_itemsize, extra_bf16_tiles, full_h):
    """Rough double-buffered VMEM footprint of one SwiGLU tile step."""
    w = 3 * d_dim * th * 2 * 2                     # W1/W3/W2 bf16, double-buffered
    x = tm * d_dim * 2 * 2                         # x tile (bf16)
    o = tm * d_dim * out_itemsize * 2              # output tile
    extra = extra_bf16_tiles * tm * d_dim * 2 * 2  # e.g. resident routed tile
    acc = 0 if full_h else tm * d_dim * 4          # f32 accumulator scratch
    return w + x + o + extra + acc + tm * 16


def _pick_h_tile(d_dim, h_dim, tm, budget, out_itemsize=2, extra_bf16_tiles=0):
    """Prefer full H (=> weight residency across same-expert token tiles); else
    the largest 128-multiple tile that fits the budget."""
    if _swiglu_vmem_bytes(tm, d_dim, h_dim, out_itemsize, extra_bf16_tiles, True) <= budget:
        return h_dim
    for c in (512, 256, 128):
        if h_dim % c == 0 and _swiglu_vmem_bytes(
                tm, d_dim, c, out_itemsize, extra_bf16_tiles, False) <= budget:
            return c
    for c in (128, 256, 512):
        if h_dim % c == 0:
            return c
    return h_dim


# ---------------------------------------------------------------------------
# Pallas kernel 1: routed experts (grouped / sorted token tiles, P2 prefetch)
# ---------------------------------------------------------------------------
def _routed_kernel_fullh(te_ref, tv_ref, gate_ref, x_ref, w1_ref, w3_ref,
                         w2_ref, o_ref):
    """grid = (num_token_tiles,); full-H expert weights resident per expert."""
    i = pl.program_id(0)

    @pl.when(tv_ref[i] != 0)
    def _():
        x = x_ref[...]                                                    # (tm, D) bf16
        h1 = jnp.dot(x, w1_ref[...], preferred_element_type=jnp.float32)  # (tm, H)
        h3 = jnp.dot(x, w3_ref[...], preferred_element_type=jnp.float32)  # (tm, H)
        hh = ((h1 * jax.nn.sigmoid(h1)) * h3).astype(x.dtype)             # SwiGLU bf16
        y = jnp.dot(hh, w2_ref[...], preferred_element_type=jnp.float32)  # (tm, D) f32
        o_ref[...] = (gate_ref[...] * y).astype(o_ref.dtype)              # gate fold

    @pl.when(tv_ref[i] == 0)
    def _():
        o_ref[...] = jnp.zeros_like(o_ref)


def _routed_kernel_htiled(te_ref, tv_ref, gate_ref, x_ref, w1_ref, w3_ref,
                          w2_ref, o_ref, acc_ref):
    """grid = (num_token_tiles, num_h_tiles); f32 accumulator over the h reduction."""
    i = pl.program_id(0)
    h = pl.program_id(1)

    @pl.when(h == 0)
    def _():
        acc_ref[...] = jnp.zeros_like(acc_ref)

    @pl.when(tv_ref[i] != 0)
    def _():
        x = x_ref[...]
        h1 = jnp.dot(x, w1_ref[...], preferred_element_type=jnp.float32)
        h3 = jnp.dot(x, w3_ref[...], preferred_element_type=jnp.float32)
        hh = ((h1 * jax.nn.sigmoid(h1)) * h3).astype(x.dtype)
        acc_ref[...] += jnp.dot(hh, w2_ref[...],
                                preferred_element_type=jnp.float32)

    @pl.when(h == pl.num_programs(1) - 1)
    def _():
        o_ref[...] = (gate_ref[...] * acc_ref[...]).astype(o_ref.dtype)


def routed_experts(x_sorted, gate_sorted, tile_expert, tile_valid,
                   w1, w3, w2, *, tm, th):
    """x_sorted: (Ts, D) bf16 tokens grouped by expert (tile-aligned, padded).
    gate_sorted: (Ts, 1) f32 combine weights (0 for padding rows).
    tile_expert/tile_valid: (Ts//tm,) int32 scalar-prefetch metadata.
    w1, w3: (E, D, H) bf16; w2: (E, H, D) bf16.  Returns (Ts, D) bf16."""
    Ts, D = x_sorted.shape
    E, _, H = w1.shape
    num_tiles = Ts // tm
    full_h = (th == H)

    ce = pl.CostEstimate(
        flops=6 * Ts * D * H,
        transcendentals=Ts * H,
        bytes_accessed=3 * D * H * 2 * E + Ts * D * 2 * 2 + Ts * 8)

    if full_h:
        grid_spec = pltpu.PrefetchScalarGridSpec(
            num_scalar_prefetch=2,
            grid=(num_tiles,),
            in_specs=[
                pl.BlockSpec((tm, 1), lambda i, te, tv: (i, 0)),              # gate
                pl.BlockSpec((tm, D), lambda i, te, tv: (i, 0)),              # tokens
                pl.BlockSpec((None, D, H), lambda i, te, tv: (te[i], 0, 0)),  # W1_e
                pl.BlockSpec((None, D, H), lambda i, te, tv: (te[i], 0, 0)),  # W3_e
                pl.BlockSpec((None, H, D), lambda i, te, tv: (te[i], 0, 0)),  # W2_e
            ],
            out_specs=pl.BlockSpec((tm, D), lambda i, te, tv: (i, 0)),
        )
        kernel = _routed_kernel_fullh
        dims = ("parallel",)
    else:
        num_h = H // th
        grid_spec = pltpu.PrefetchScalarGridSpec(
            num_scalar_prefetch=2,
            grid=(num_tiles, num_h),
            in_specs=[
                pl.BlockSpec((tm, 1), lambda i, h, te, tv: (i, 0)),
                pl.BlockSpec((tm, D), lambda i, h, te, tv: (i, 0)),
                pl.BlockSpec((None, D, th), lambda i, h, te, tv: (te[i], 0, h)),
                pl.BlockSpec((None, D, th), lambda i, h, te, tv: (te[i], 0, h)),
                pl.BlockSpec((None, th, D), lambda i, h, te, tv: (te[i], h, 0)),
            ],
            out_specs=pl.BlockSpec((tm, D), lambda i, h, te, tv: (i, 0)),
            scratch_shapes=[pltpu.VMEM((tm, D), jnp.float32)],
        )
        kernel = _routed_kernel_htiled
        dims = ("parallel", "arbitrary")

    return pl.pallas_call(
        kernel,
        out_shape=jax.ShapeDtypeStruct((Ts, D), jnp.bfloat16),
        grid_spec=grid_spec,
        compiler_params=pltpu.CompilerParams(
            dimension_semantics=dims,
            vmem_limit_bytes=_VMEM_LIMIT),
        cost_estimate=ce,
    )(tile_expert, tile_valid, gate_sorted, x_sorted, w1, w3, w2)


# ---------------------------------------------------------------------------
# Pallas kernel 2: shared-expert SwiGLU MLP fused with the coefficient blend
#   out = routed * coef0 + swiglu_mlp(x) * (1 - coef0)
# ---------------------------------------------------------------------------
def _shared_blend_fullh_kernel(x_ref, w1_ref, w3_ref, w2_ref, c0_ref,
                               routed_ref, o_ref):
    x = x_ref[...]
    h1 = jnp.dot(x, w1_ref[...], preferred_element_type=jnp.float32)
    h3 = jnp.dot(x, w3_ref[...], preferred_element_type=jnp.float32)
    hh = ((h1 * jax.nn.sigmoid(h1)) * h3).astype(x.dtype)
    mlp = jnp.dot(hh, w2_ref[...], preferred_element_type=jnp.float32)
    c0 = c0_ref[...]                                                     # (tm, 1)
    o_ref[...] = (routed_ref[...].astype(jnp.float32) * c0
                  + mlp * (1.0 - c0)).astype(o_ref.dtype)


def _shared_blend_htiled_kernel(x_ref, w1_ref, w3_ref, w2_ref, c0_ref,
                                routed_ref, o_ref, acc_ref):
    h = pl.program_id(1)

    @pl.when(h == 0)
    def _():
        acc_ref[...] = jnp.zeros_like(acc_ref)

    x = x_ref[...]
    h1 = jnp.dot(x, w1_ref[...], preferred_element_type=jnp.float32)
    h3 = jnp.dot(x, w3_ref[...], preferred_element_type=jnp.float32)
    hh = ((h1 * jax.nn.sigmoid(h1)) * h3).astype(x.dtype)
    acc_ref[...] += jnp.dot(hh, w2_ref[...], preferred_element_type=jnp.float32)

    @pl.when(h == pl.num_programs(1) - 1)
    def _():
        c0 = c0_ref[...]
        o_ref[...] = (routed_ref[...].astype(jnp.float32) * c0
                      + acc_ref[...] * (1.0 - c0)).astype(o_ref.dtype)


def shared_expert_blend(x, w1, w3, w2, c0, routed, *, out_dtype, tm, th):
    """x, routed: (Tp, D) bf16; w1, w3: (D, Hs) bf16; w2: (Hs, D) bf16;
    c0: (Tp, 1) f32 coefficient for the routed path."""
    Tp, D = x.shape
    Hs = w1.shape[1]
    full_h = (th == Hs)
    out_itemsize = jnp.dtype(out_dtype).itemsize

    ce = pl.CostEstimate(
        flops=6 * Tp * D * Hs + 4 * Tp * D,
        transcendentals=Tp * Hs,
        bytes_accessed=3 * D * Hs * 2 + Tp * D * (2 + 2 + out_itemsize) + Tp * 4)

    if full_h:
        grid_spec = pltpu.PrefetchScalarGridSpec(
            num_scalar_prefetch=0,
            grid=(Tp // tm,),
            in_specs=[
                pl.BlockSpec((tm, D), lambda i: (i, 0)),
                pl.BlockSpec((D, Hs), lambda i: (0, 0)),   # resident (DMA'd once)
                pl.BlockSpec((D, Hs), lambda i: (0, 0)),
                pl.BlockSpec((Hs, D), lambda i: (0, 0)),
                pl.BlockSpec((tm, 1), lambda i: (i, 0)),
                pl.BlockSpec((tm, D), lambda i: (i, 0)),
            ],
            out_specs=pl.BlockSpec((tm, D), lambda i: (i, 0)),
        )
        kernel = _shared_blend_fullh_kernel
        dims = ("parallel",)
    else:
        grid_spec = pltpu.PrefetchScalarGridSpec(
            num_scalar_prefetch=0,
            grid=(Tp // tm, Hs // th),
            in_specs=[
                pl.BlockSpec((tm, D), lambda i, h: (i, 0)),
                pl.BlockSpec((D, th), lambda i, h: (0, h)),
                pl.BlockSpec((D, th), lambda i, h: (0, h)),
                pl.BlockSpec((th, D), lambda i, h: (h, 0)),
                pl.BlockSpec((tm, 1), lambda i, h: (i, 0)),
                pl.BlockSpec((tm, D), lambda i, h: (i, 0)),
            ],
            out_specs=pl.BlockSpec((tm, D), lambda i, h: (i, 0)),
            scratch_shapes=[pltpu.VMEM((tm, D), jnp.float32)],
        )
        kernel = _shared_blend_htiled_kernel
        dims = ("parallel", "arbitrary")

    return pl.pallas_call(
        kernel,
        out_shape=jax.ShapeDtypeStruct((Tp, D), out_dtype),
        grid_spec=grid_spec,
        compiler_params=pltpu.CompilerParams(
            dimension_semantics=dims,
            vmem_limit_bytes=_VMEM_LIMIT),
        cost_estimate=ce,
    )(x, w1, w3, w2, c0, routed)


# ---------------------------------------------------------------------------
# Full MoE forward (mirrors MoE.forward)
# ---------------------------------------------------------------------------
@functools.partial(jax.jit, static_argnames=("num_experts", "top_k",
                                             "num_shared_experts"))
def moe_forward(hidden_states, params, *, num_experts, top_k, num_shared_experts):
    B, S, D = hidden_states.shape
    T = B * S
    E = num_experts
    x = hidden_states.reshape(T, D)
    x_f32 = x.astype(jnp.float32)
    x_bf16 = x.astype(jnp.bfloat16)

    # ---- fp32 gate (softmax + top-k, re-normalized) + aux loss --------------
    logits = jnp.dot(x_f32, params["gate_w"].astype(jnp.float32))        # (T, E)
    probs = jax.nn.softmax(logits, axis=-1)
    top_v, top_i = jax.lax.top_k(probs, top_k)                           # (T, k)
    top_w = top_v / jnp.sum(top_v, axis=-1, keepdims=True)

    me = jnp.mean(probs, axis=0)
    mask1 = jax.nn.one_hot(top_i[:, 0], E, dtype=jnp.float32)
    ce_frac = jnp.mean(mask1, axis=0)
    l_aux = E * jnp.sum(me * ce_frac)

    # ---- token -> expert routing metadata (static shapes, dynamic values) ---
    Tk = T * top_k
    tm = _pick_token_tile(Tk, E)

    flat_expert = top_i.reshape(-1).astype(jnp.int32)                    # (Tk,)
    flat_weight = top_w.reshape(-1).astype(jnp.float32)                  # (Tk,)
    flat_token = jnp.repeat(jnp.arange(T, dtype=jnp.int32), top_k)       # (Tk,)

    order = jnp.argsort(flat_expert, stable=True)
    sorted_expert = flat_expert[order]
    sorted_token = flat_token[order]
    sorted_weight = flat_weight[order]

    counts = jnp.bincount(flat_expert, length=E).astype(jnp.int32)       # (E,)
    padded_counts = ((counts + tm - 1) // tm) * tm                       # tile aligned
    group_start = jnp.cumsum(counts) - counts
    padded_end = jnp.cumsum(padded_counts)
    padded_start = padded_end - padded_counts

    within = jnp.arange(Tk, dtype=jnp.int32) - group_start[sorted_expert]
    pos = padded_start[sorted_expert] + within                           # dest slot

    # static, tile-aligned upper bound on the padded sorted length
    Ts = (-(-Tk // tm)) * tm + E * tm
    tok_padded = jnp.zeros((Ts,), jnp.int32).at[pos].set(sorted_token)
    gate_padded = jnp.zeros((Ts, 1), jnp.float32).at[pos, 0].set(sorted_weight)

    num_tiles = Ts // tm
    tile_start = jnp.arange(num_tiles, dtype=jnp.int32) * tm
    te_raw = jnp.searchsorted(padded_end, tile_start, side="right")
    tile_valid = (te_raw < E).astype(jnp.int32)
    tile_expert = jnp.minimum(te_raw, E - 1).astype(jnp.int32)

    # TODO(synk): fuse this (Ts, D) row gather into the routed kernel via per-row DMA.
    x_sorted = x_bf16[tok_padded]                                        # (Ts, D)

    # ---- routed experts (grouped GEMM Pallas kernel) -------------------------
    H = params["exp_w1"].shape[2]
    th = _pick_h_tile(D, H, tm, _TILE_BUDGET)
    out_sorted = routed_experts(
        x_sorted, gate_padded, tile_expert, tile_valid,
        params["exp_w1"].astype(jnp.bfloat16),
        params["exp_w3"].astype(jnp.bfloat16),
        params["exp_w2"].astype(jnp.bfloat16),
        tm=tm, th=th)                                                    # (Ts, D) bf16

    # ---- combine: inverse-permutation gather + top_k reduce (no scatter-add)
    inv_order = jnp.zeros((Tk,), jnp.int32).at[order].set(
        jnp.arange(Tk, dtype=jnp.int32))
    slot_for_flat = pos[inv_order]                                       # (Tk,)
    gathered = out_sorted[slot_for_flat]                                 # (Tk, D) bf16
    routed = gathered.astype(jnp.float32).reshape(T, top_k, D).sum(axis=1)  # (T,D) f32
    exp_counts = counts

    if num_shared_experts > 0:
        Hs = params["sh_w1"].shape[1]
        coef_logits = (jnp.dot(x_f32, params["coef_w"].astype(jnp.float32))
                       + params["coef_b"].astype(jnp.float32))           # (T, 2)
        coef = jax.nn.softmax(coef_logits, axis=-1)
        c0 = coef[:, 0:1]                                                # (T, 1)

        tms = _pick_token_tile(T)
        Tp = _round_up(T, tms)
        pad = Tp - T
        routed_bf16 = routed.astype(jnp.bfloat16)
        x_p, routed_p, c0_p = x_bf16, routed_bf16, c0
        if pad:
            x_p = jnp.pad(x_p, ((0, pad), (0, 0)))
            routed_p = jnp.pad(routed_p, ((0, pad), (0, 0)))
            c0_p = jnp.pad(c0_p, ((0, pad), (0, 0)))

        out_itemsize = jnp.dtype(hidden_states.dtype).itemsize
        ths = _pick_h_tile(D, Hs, tms, _TILE_BUDGET,
                           out_itemsize=out_itemsize, extra_bf16_tiles=1)
        out_p = shared_expert_blend(
            x_p,
            params["sh_w1"].astype(jnp.bfloat16),
            params["sh_w3"].astype(jnp.bfloat16),
            params["sh_w2"].astype(jnp.bfloat16),
            c0_p, routed_p,
            out_dtype=hidden_states.dtype, tm=tms, th=ths)
        out = out_p[:T] if pad else out_p
    else:
        out = routed.astype(hidden_states.dtype)

    return out.reshape(B, S, D), l_aux, exp_counts


# ---------------------------------------------------------------------------
def init_params(key, in_features, hidden_features, num_experts,
                num_shared_experts):
    D, H = in_features, hidden_features
    ks = jax.random.split(key, 8)
    scale = 0.02
    p = {
        "gate_w":  scale * jax.random.normal(ks[0], (D, num_experts), jnp.float32),
        "exp_w1":  scale * jax.random.normal(ks[1], (num_experts, D, H), jnp.float32),
        "exp_w3":  scale * jax.random.normal(ks[2], (num_experts, D, H), jnp.float32),
        "exp_w2":  scale * jax.random.normal(ks[3], (num_experts, H, D), jnp.float32),
    }
    if num_shared_experts > 0:
        Hs = H * num_shared_experts
        p.update({
            "sh_w1": scale * jax.random.normal(ks[4], (D, Hs), jnp.float32),
            "sh_w3": scale * jax.random.normal(ks[5], (D, Hs), jnp.float32),
            "sh_w2": scale * jax.random.normal(ks[6], (Hs, D), jnp.float32),
            "coef_w": scale * jax.random.normal(ks[7], (D, 2), jnp.float32),
            "coef_b": jnp.zeros((2,), jnp.float32),
        })
    return p


if __name__ == "__main__":
    # Small shapes consistent with the module's forward contract.
    B, S, D, H = 2, 8, 32, 64
    num_experts, top_k, num_shared_experts = 4, 2, 1

    key = jax.random.PRNGKey(0)
    k_x, k_p = jax.random.split(key)
    hidden_states = jax.random.normal(k_x, (B, S, D), jnp.float32)
    params = init_params(k_p, D, H, num_experts, num_shared_experts)

    out, l_aux, exp_counts = moe_forward(
        hidden_states, params,
        num_experts=num_experts, top_k=top_k,
        num_shared_experts=num_shared_experts)
    jax.block_until_ready((out, l_aux, exp_counts))

    assert out.shape == (B, S, D)
    assert l_aux.shape == ()
    assert exp_counts.shape == (num_experts,)
    assert bool(jnp.all(jnp.isfinite(out)))
    print("KERNEL_OK")
</pallas_src>

<mosaic_0001>
module attributes {stable_mosaic.version = 11 : i64} {
  func.func @_routed_kernel_fullh(%arg0: i32, %arg1: memref<6xi32, #tpu.memory_space<smem>>, %arg2: memref<6xi32, #tpu.memory_space<smem>>, %arg3: memref<16x1xf32, #tpu.memory_space<vmem>>, %arg4: memref<16x32xbf16, #tpu.memory_space<vmem>>, %arg5: memref<1x32x64xbf16, #tpu.memory_space<vmem>>, %arg6: memref<1x32x64xbf16, #tpu.memory_space<vmem>>, %arg7: memref<1x64x32xbf16, #tpu.memory_space<vmem>>, %arg8: memref<16x32xbf16, #tpu.memory_space<vmem>>) attributes {dimension_semantics = [#tpu.dimension_semantics<parallel>], iteration_bounds = array<i64: 6>, scalar_prefetch = 2 : i64, scratch_operands = 0 : i64, tpu.core_type = #tpu.core_type<tc>, window_params = [{transform_indices = @transform_0, window_bounds = array<i64: 16, 1>}, {transform_indices = @transform_1, window_bounds = array<i64: 16, 32>}, {transform_indices = @transform_2, window_bounds = array<i64: 1, 32, 64>}, {transform_indices = @transform_3, window_bounds = array<i64: 1, 32, 64>}, {transform_indices = @transform_4, window_bounds = array<i64: 1, 64, 32>}, {transform_indices = @transform_5, window_bounds = array<i64: 16, 32>}]} {
    %0 = arith.index_cast %arg0 : i32 to index
    %1 = memref.load %arg2[%0] : memref<6xi32, #tpu.memory_space<smem>>
    %c0_i32 = arith.constant 0 : i32
    %2 = arith.cmpi ne, %1, %c0_i32 : i32
    %3 = arith.extui %2 : i1 to i32
    %c0_i32_0 = arith.constant 0 : i32
    %4 = arith.cmpi ne, %3, %c0_i32_0 : i32
    scf.if %4 {
      %c0 = arith.constant 0 : index
      %c0_3 = arith.constant 0 : index
      %10 = vector.load %arg4[%c0, %c0_3] : memref<16x32xbf16, #tpu.memory_space<vmem>>, vector<16x32xbf16>
      %c0_4 = arith.constant 0 : index
      %c0_5 = arith.constant 0 : index
      %c0_6 = arith.constant 0 : index
      %11 = vector.load %arg5[%c0_4, %c0_5, %c0_6] : memref<1x32x64xbf16, #tpu.memory_space<vmem>>, vector<1x32x64xbf16>
      %12 = vector.shape_cast %11 : vector<1x32x64xbf16> to vector<32x64xbf16>
      %cst = arith.constant dense<0.000000e+00> : vector<16x64xf32>
      %13 = tpu.matmul %10, %12, %cst {dimension_numbers = #tpu.dot_dimension_numbers<[1], [0], [0], [1], [0, 0, 1, 1], [], []>} : vector<16x32xbf16>, vector<32x64xbf16>, vector<16x64xf32> -> vector<16x64xf32>
      %c0_7 = arith.constant 0 : index
      %c0_8 = arith.constant 0 : index
      %c0_9 = arith.constant 0 : index
      %14 = vector.load %arg6[%c0_7, %c0_8, %c0_9] : memref<1x32x64xbf16, #tpu.memory_space<vmem>>, vector<1x32x64xbf16>
      %15 = vector.shape_cast %14 : vector<1x32x64xbf16> to vector<32x64xbf16>
      %cst_10 = arith.constant dense<0.000000e+00> : vector<16x64xf32>
      %16 = tpu.matmul %10, %15, %cst_10 {dimension_numbers = #tpu.dot_dimension_numbers<[1], [0], [0], [1], [0, 0, 1, 1], [], []>} : vector<16x32xbf16>, vector<32x64xbf16>, vector<16x64xf32> -> vector<16x64xf32>
      %17 = arith.negf %13 : vector<16x64xf32>
      %18 = math.exp %17 : vector<16x64xf32>
      %cst_11 = arith.constant 1.000000e+00 : f32
      %19 = vector.broadcast %cst_11 : f32 to vector<16x64xf32>
      %20 = arith.addf %19, %18 : vector<16x64xf32>
      %21 = arith.divf %19, %20 : vector<16x64xf32>
      %22 = arith.mulf %13, %21 : vector<16x64xf32>
      %23 = arith.mulf %22, %16 : vector<16x64xf32>
      %24 = arith.truncf %23 : vector<16x64xf32> to vector<16x64xbf16>
      %c0_12 = arith.constant 0 : index
      %c0_13 = arith.constant 0 : index
      %c0_14 = arith.constant 0 : index
      %25 = vector.load %arg7[%c0_12, %c0_13, %c0_14] : memref<1x64x32xbf16, #tpu.memory_space<vmem>>, vector<1x64x32xbf16>
      %26 = vector.shape_cast %25 : vector<1x64x32xbf16> to vector<64x32xbf16>
      %cst_15 = arith.constant dense<0.000000e+00> : vector<16x32xf32>
      %27 = tpu.matmul %24, %26, %cst_15 {dimension_numbers = #tpu.dot_dimension_numbers<[1], [0], [0], [1], [0, 0, 1, 1], [], []>} : vector<16x64xbf16>, vector<64x32xbf16>, vector<16x32xf32> -> vector<16x32xf32>
      %c0_16 = arith.constant 0 : index
      %c0_17 = arith.constant 0 : index
      %28 = vector.load %arg3[%c0_16, %c0_17] : memref<16x1xf32, #tpu.memory_space<vmem>>, vector<16x1xf32>
      %29 = vector.broadcast %28 : vector<16x1xf32> to vector<16x32xf32>
      %30 = arith.mulf %29, %27 : vector<16x32xf32>
      %31 = arith.truncf %30 : vector<16x32xf32> to vector<16x32xbf16>
      %c0_18 = arith.constant 0 : index
      %c0_19 = arith.constant 0 : index
      %32 = vector.load %arg8[%c0_18, %c0_19] : memref<16x32xbf16, #tpu.memory_space<vmem>>, vector<16x32xbf16>
      tpu.vector_store %arg8[%c0_18, %c0_19], %31 {strides = array<i32>} : memref<16x32xbf16, #tpu.memory_space<vmem>>, vector<16x32xbf16>,
    } else {
    }
    %5 = arith.index_cast %arg0 : i32 to index
    %6 = memref.load %arg2[%5] : memref<6xi32, #tpu.memory_space<smem>>
    %c0_i32_1 = arith.constant 0 : i32
    %7 = arith.cmpi eq, %6, %c0_i32_1 : i32
    %8 = arith.extui %7 : i1 to i32
    %c0_i32_2 = arith.constant 0 : i32
    %9 = arith.cmpi ne, %8, %c0_i32_2 : i32
    scf.if %9 {
      %cst = arith.constant 0.000000e+00 : bf16
      %10 = vector.broadcast %cst : bf16 to vector<16x32xbf16>
      %c0 = arith.constant 0 : index
      %c0_3 = arith.constant 0 : index
      %11 = vector.load %arg8[%c0, %c0_3] : memref<16x32xbf16, #tpu.memory_space<vmem>>, vector<16x32xbf16>
      tpu.vector_store %arg8[%c0, %c0_3], %10 {strides = array<i32>} : memref<16x32xbf16, #tpu.memory_space<vmem>>, vector<16x32xbf16>,
    } else {
    }
    return
  }
  func.func @transform_0(%arg0: i32, %arg1: memref<6xi32, #tpu.memory_space<smem>>, %arg2: memref<6xi32, #tpu.memory_space<smem>>) -> (i32, i32) {
    %c0_i32 = arith.constant 0 : i32
    %c0_i32_0 = arith.constant 0 : i32
    return %arg0, %c0_i32 : i32, i32
  }
  func.func @transform_1(%arg0: i32, %arg1: memref<6xi32, #tpu.memory_space<smem>>, %arg2: memref<6xi32, #tpu.memory_space<smem>>) -> (i32, i32) {
    %c0_i32 = arith.constant 0 : i32
    %c0_i32_0 = arith.constant 0 : i32
    return %arg0, %c0_i32 : i32, i32
  }
  func.func @transform_2(%arg0: i32, %arg1: memref<6xi32, #tpu.memory_space<smem>>, %arg2: memref<6xi32, #tpu.memory_space<smem>>) -> (i32, i32, i32) {
    %0 = arith.index_cast %arg0 : i32 to index
    %1 = memref.load %arg1[%0] : memref<6xi32, #tpu.memory_space<smem>>
    %c0_i32 = arith.constant 0 : i32
    %c0_i32_0 = arith.constant 0 : i32
    %c0_i32_1 = arith.constant 0 : i32
    return %1, %c0_i32, %c0_i32_0 : i32, i32, i32
  }
  func.func @transform_3(%arg0: i32, %arg1: memref<6xi32, #tpu.memory_space<smem>>, %arg2: memref<6xi32, #tpu.memory_space<smem>>) -> (i32, i32, i32) {
    %0 = arith.index_cast %arg0 : i32 to index
    %1 = memref.load %arg1[%0] : memref<6xi32, #tpu.memory_space<smem>>
    %c0_i32 = arith.constant 0 : i32
    %c0_i32_0 = arith.constant 0 : i32
    %c0_i32_1 = arith.constant 0 : i32
    return %1, %c0_i32, %c0_i32_0 : i32, i32, i32
  }
  func.func @transform_4(%arg0: i32, %arg1: memref<6xi32, #tpu.memory_space<smem>>, %arg2: memref<6xi32, #tpu.memory_space<smem>>) -> (i32, i32, i32) {
    %0 = arith.index_cast %arg0 : i32 to index
    %1 = memref.load %arg1[%0] : memref<6xi32, #tpu.memory_space<smem>>
    %c0_i32 = arith.constant 0 : i32
    %c0_i32_0 = arith.constant 0 : i32
    %c0_i32_1 = arith.constant 0 : i32
    return %1, %c0_i32, %c0_i32_0 : i32, i32, i32
  }
  func.func @transform_5(%arg0: i32, %arg1: memref<6xi32, #tpu.memory_space<smem>>, %arg2: memref<6xi32, #tpu.memory_space<smem>>) -> (i32, i32) {
    %c0_i32 = arith.constant 0 : i32
    %c0_i32_0 = arith.constant 0 : i32
    return %arg0, %c0_i32 : i32, i32
  }
}

module attributes {stable_mosaic.version = 11 : i64} {
  func.func @_shared_blend_fullh_kernel(%arg0: i32, %arg1: memref<16x32xbf16, #tpu.memory_space<vmem>>, %arg2: memref<32x64xbf16, #tpu.memory_space<vmem>>, %arg3: memref<32x64xbf16, #tpu.memory_space<vmem>>, %arg4: memref<64x32xbf16, #tpu.memory_space<vmem>>, %arg5: memref<16x1xf32, #tpu.memory_space<vmem>>, %arg6: memref<16x32xbf16, #tpu.memory_space<vmem>>, %arg7: memref<16x32xf32, #tpu.memory_space<vmem>>) attributes {dimension_semantics = [#tpu.dimension_semantics<parallel>], iteration_bounds = array<i64: 1>, scalar_prefetch = 0 : i64, scratch_operands = 0 : i64, tpu.core_type = #tpu.core_type<tc>, window_params = [{transform_indices = @transform_0, window_bounds = array<i64: 16, 32>}, {pipeline_mode = #tpu.pipeline_mode<synchronous>, transform_indices = @transform_1, window_bounds = array<i64: 32, 64>}, {pipeline_mode = #tpu.pipeline_mode<synchronous>, transform_indices = @transform_2, window_bounds = array<i64: 32, 64>}, {pipeline_mode = #tpu.pipeline_mode<synchronous>, transform_indices = @transform_3, window_bounds = array<i64: 64, 32>}, {transform_indices = @transform_4, window_bounds = array<i64: 16, 1>}, {transform_indices = @transform_5, window_bounds = array<i64: 16, 32>}, {transform_indices = @transform_6, window_bounds = array<i64: 16, 32>}]} {
    %c0 = arith.constant 0 : index
    %c0_0 = arith.constant 0 : index
    %0 = vector.load %arg1[%c0, %c0_0] : memref<16x32xbf16, #tpu.memory_space<vmem>>, vector<16x32xbf16>
    %c0_1 = arith.constant 0 : index
    %c0_2 = arith.constant 0 : index
    %1 = vector.load %arg2[%c0_1, %c0_2] : memref<32x64xbf16, #tpu.memory_space<vmem>>, vector<32x64xbf16>
    %cst = arith.constant dense<0.000000e+00> : vector<16x64xf32>
    %2 = tpu.matmul %0, %1, %cst {dimension_numbers = #tpu.dot_dimension_numbers<[1], [0], [0], [1], [0, 0, 1, 1], [], []>} : vector<16x32xbf16>, vector<32x64xbf16>, vector<16x64xf32> -> vector<16x64xf32>
    %c0_3 = arith.constant 0 : index
    %c0_4 = arith.constant 0 : index
    %3 = vector.load %arg3[%c0_3, %c0_4] : memref<32x64xbf16, #tpu.memory_space<vmem>>, vector<32x64xbf16>
    %cst_5 = arith.constant dense<0.000000e+00> : vector<16x64xf32>
    %4 = tpu.matmul %0, %3, %cst_5 {dimension_numbers = #tpu.dot_dimension_numbers<[1], [0], [0], [1], [0, 0, 1, 1], [], []>} : vector<16x32xbf16>, vector<32x64xbf16>, vector<16x64xf32> -> vector<16x64xf32>
    %5 = arith.negf %2 : vector<16x64xf32>
    %6 = math.exp %5 : vector<16x64xf32>
    %cst_6 = arith.constant 1.000000e+00 : f32
    %7 = vector.broadcast %cst_6 : f32 to vector<16x64xf32>
    %8 = arith.addf %7, %6 : vector<16x64xf32>
    %9 = arith.divf %7, %8 : vector<16x64xf32>
    %10 = arith.mulf %2, %9 : vector<16x64xf32>
    %11 = arith.mulf %10, %4 : vector<16x64xf32>
    %12 = arith.truncf %11 : vector<16x64xf32> to vector<16x64xbf16>
    %c0_7 = arith.constant 0 : index
    %c0_8 = arith.constant 0 : index
    %13 = vector.load %arg4[%c0_7, %c0_8] : memref<64x32xbf16, #tpu.memory_space<vmem>>, vector<64x32xbf16>
    %cst_9 = arith.constant dense<0.000000e+00> : vector<16x32xf32>
    %14 = tpu.matmul %12, %13, %cst_9 {dimension_numbers = #tpu.dot_dimension_numbers<[1], [0], [0], [1], [0, 0, 1, 1], [], []>} : vector<16x64xbf16>, vector<64x32xbf16>, vector<16x32xf32> -> vector<16x32xf32>
    %c0_10 = arith.constant 0 : index
    %c0_11 = arith.constant 0 : index
    %15 = vector.load %arg5[%c0_10, %c0_11] : memref<16x1xf32, #tpu.memory_space<vmem>>, vector<16x1xf32>
    %c0_12 = arith.constant 0 : index
    %c0_13 = arith.constant 0 : index
    %16 = vector.load %arg6[%c0_12, %c0_13] : memref<16x32xbf16, #tpu.memory_space<vmem>>, vector<16x32xbf16>
    %17 = arith.extf %16 : vector<16x32xbf16> to vector<16x32xf32>
    %18 = vector.broadcast %15 : vector<16x1xf32> to vector<16x32xf32>
    %19 = arith.mulf %17, %18 : vector<16x32xf32>
    %cst_14 = arith.constant 1.000000e+00 : f32
    %20 = vector.broadcast %cst_14 : f32 to vector<16x1xf32>
    %21 = arith.subf %20, %15 : vector<16x1xf32>
    %22 = vector.broadcast %21 : vector<16x1xf32> to vector<16x32xf32>
    %23 = arith.mulf %14, %22 : vector<16x32xf32>
    %24 = arith.addf %19, %23 : vector<16x32xf32>
    %c0_15 = arith.constant 0 : index
    %c0_16 = arith.constant 0 : index
    %25 = vector.load %arg7[%c0_15, %c0_16] : memref<16x32xf32, #tpu.memory_space<vmem>>, vector<16x32xf32>
    tpu.vector_store %arg7[%c0_15, %c0_16], %24 {strides = array<i32>} : memref<16x32xf32, #tpu.memory_space<vmem>>, vector<16x32xf32>,
    return
  }
  func.func @transform_0(%arg0: i32) -> (i32, i32) {
    %c0_i32 = arith.constant 0 : i32
    %c0_i32_0 = arith.constant 0 : i32
    return %arg0, %c0_i32 : i32, i32
  }
  func.func @transform_1(%arg0: i32) -> (i32, i32) {
    %c0_i32 = arith.constant 0 : i32
    %c0_i32_0 = arith.constant 0 : i32
    %c0_i32_1 = arith.constant 0 : i32
    return %c0_i32, %c0_i32_0 : i32, i32
  }
  func.func @transform_2(%arg0: i32) -> (i32, i32) {
    %c0_i32 = arith.constant 0 : i32
    %c0_i32_0 = arith.constant 0 : i32
    %c0_i32_1 = arith.constant 0 : i32
    return %c0_i32, %c0_i32_0 : i32, i32
  }
  func.func @transform_3(%arg0: i32) -> (i32, i32) {
    %c0_i32 = arith.constant 0 : i32
    %c0_i32_0 = arith.constant 0 : i32
    %c0_i32_1 = arith.constant 0 : i32
    return %c0_i32, %c0_i32_0 : i32, i32
  }
  func.func @transform_4(%arg0: i32) -> (i32, i32) {
    %c0_i32 = arith.constant 0 : i32
    %c0_i32_0 = arith.constant 0 : i32
    return %arg0, %c0_i32 : i32, i32
  }
  func.func @transform_5(%arg0: i32) -> (i32, i32) {
    %c0_i32 = arith.constant 0 : i32
    %c0_i32_0 = arith.constant 0 : i32
    return %arg0, %c0_i32 : i32, i32
  }
  func.func @transform_6(%arg0: i32) -> (i32, i32) {
    %c0_i32 = arith.constant 0 : i32
    %c0_i32_0 = arith.constant 0 : i32
    return %arg0, %c0_i32 : i32, i32
  }
}

</mosaic_0001>

<llo_original>
// kernel: custom-call
$region0: #{custom-call}
  %s0 = inlined_call_operand.vmem [shape: u32[6], index: 0, kind: output, shape index: {}]

// kernel: moe_forward.2
$region0: #{moe_forward.2}
  #allocation0 [shape = 'u32[]', space=smem, size = 0x4, offset = 0x4, fixed_abs, tag = 'smem constant byte address 0x4 - core index']
  #allocation1 [shape = 'u32[72,128]{1,0:T(1,128)}', space=vmem, size = 0x9000, scoped, tag = 'internal scratch']
  #allocation2 [shape = 's32[1]{0}', space=sflag, size = 0x4, scoped, tag = 'scoped memory for moe_forward.2']
  #allocation3 [shape = 'u8[512]{0}', space=smem, size = 0x200, scoped, tag = 'prefetched SMEM operand 0']
  #allocation4 [shape = 'u8[512]{0}', space=smem, size = 0x200, scoped, tag = 'prefetched SMEM operand 1']
  %s0 = inlined_call_operand.vmem [shape: s32[6], index: 0, kind: input, shape index: {}]
  %s1 = inlined_call_operand.vmem [shape: s32[6], index: 1, kind: input, shape index: {}]
  %s2 = inlined_call_operand.vmem [shape: f32[96,1], index: 2, kind: input, shape index: {}]
  %s3 = inlined_call_operand.vmem [shape: bf16[96,32], index: 3, kind: input, shape index: {}]
  %s4 = inlined_call_operand.vmem [shape: bf16[4,32,64], index: 4, kind: input, shape index: {}]
  %s5 = inlined_call_operand.vmem [shape: bf16[4,32,64], index: 5, kind: input, shape index: {}]
  %s6 = inlined_call_operand.vmem [shape: bf16[4,64,32], index: 6, kind: input, shape index: {}]
  %s7 = inlined_call_operand.vmem [shape: bf16[96,32], index: 7, kind: output, shape index: {}]
  %s8 = sld [smem:[#allocation0]]
  $region61: #{moe_forward.2} parent=0
    _
  %s10 = ssub.s32 1, %s8
  %s11 = scalar_select 0, %s10, %s8
  %s13 = sshll.u32 %s0, 4
  %s14 = int_to_ptr.vmem [resolvable:$true] %s13
  %16 = dma.vmem_to_smem %s14, 16, [#allocation3], [#allocation2]
  %s18 = sshll.u32 %s1, 4
  %s19 = int_to_ptr.vmem [resolvable:$true] %s18
  %21 = dma.vmem_to_smem %s19, 16, [#allocation4], [#allocation2]
  %23 = dma.done [#allocation2], 32
  %24 = sfence
  loop: start=0, step=1, limit=8
  $region2: #{moe_forward.2} parent=0 // loop_pre_header
    _
  $region3: #{moe_forward.2} parent=0 // loop_header
    %s26 = sphi 0, %s30
    %p27 = scmp.ge.s32.totalorder %s26, 8
    %s36 = sphi 0, %s38
    %s39 = sphi 0, %s36
    %s40 = sphi 0, %s39
    %s56 = sphi 0, %s40
    %s62 = sphi 0, %s64
    %s65 = sphi 0, %s62
    %s66 = sphi 0, %s65
    %s82 = sphi 0, %s66
    %s90 = sphi 0, %s92
    %s93 = sphi 0, %s90
    %s94 = sphi 0, %s93
    %s110 = sphi 0, %s94
    %s118 = sphi 0, %s120
    %s121 = sphi 0, %s118
    %s122 = sphi 0, %s121
    %s138 = sphi 0, %s122
    %s146 = sphi 0, %s148
    %s149 = sphi 0, %s146
    %s150 = sphi 0, %s149
    %s166 = sphi 0, %s150
    %s172 = sphi 0, %s174
    %s175 = sphi 0, %s172
    %s176 = sphi 0, %s175
    %s192 = sphi 0, %s176
  $region4: #{moe_forward.2} parent=0 // loop_header_branch
    %29 = sbr.rel (%p27) target = $region8
  $region5: #{moe_forward.2} parent=0 // loop_body
    %s31 = ssub.s32 %s26, 1
    %s32 = ssub.s32 %s26, 2
    %s33 = sadd.s32 %s26, 1
    %s34 = ssub.s32 %s26, %s33
    %p35 = scmp.eq.s32.totalorder %s34, 0
    %s37 = sadd.s32 %s36, 1
    %s38 = scalar_select %p35, %s36, %s37
    %p41 = pneg %p35
    %p42 = scmp.eq.s32.totalorder %s26, 5
    %p43 = por %p41, %p42
    %p44 = scmp.ne.s32.totalorder %s36, %s39
    %p45 = scmp.eq.s32.totalorder %s26, 0
    %p46 = por %p44, %p45
    %p47 = scmp.ne.s32.totalorder %s36, %s39
    %p48 = scmp.eq.s32.totalorder %s31, 5
    %p49 = por %p47, %p48
    %p50 = scmp.ne.s32.totalorder %s39, %s40
    %p51 = scmp.eq.s32.totalorder %s31, 0
    %p52 = por %p50, %p51
    %p53 = scmp.ne.s32.totalorder %s39, %s40
    %p54 = scmp.eq.s32.totalorder %s32, 5
    %p55 = por %p53, %p54
    %p57 = scmp.ne.s32.totalorder %s40, %s56
    %p58 = scmp.eq.s32.totalorder %s32, 0
    %p59 = por %p57, %p58
    %s60 = ssub.s32 %s26, %s33
    %p61 = scmp.eq.s32.totalorder %s60, 0
    %s63 = sadd.s32 %s62, 1
    %s64 = scalar_select %p61, %s62, %s63
    %p67 = pneg %p61
    %p68 = scmp.eq.s32.totalorder %s26, 5
    %p69 = por %p67, %p68
    %p70 = scmp.ne.s32.totalorder %s62, %s65
    %p71 = scmp.eq.s32.totalorder %s26, 0
    %p72 = por %p70, %p71
    %p73 = scmp.ne.s32.totalorder %s62, %s65
    %p74 = scmp.eq.s32.totalorder %s31, 5
    %p75 = por %p73, %p74
    %p76 = scmp.ne.s32.totalorder %s65, %s66
    %p77 = scmp.eq.s32.totalorder %s31, 0
    %p78 = por %p76, %p77
    %p79 = scmp.ne.s32.totalorder %s65, %s66
    %p80 = scmp.eq.s32.totalorder %s32, 5
    %p81 = por %p79, %p80
    %p83 = scmp.ne.s32.totalorder %s66, %s82
    %p84 = scmp.eq.s32.totalorder %s32, 0
    %p85 = por %p83, %p84
    %s86 = sld [smem:[#allocation3 + %s26]]
    %s87 = sld [smem:[#allocation3 + %s33]]
    %s88 = ssub.s32 %s86, %s87
    %p89 = scmp.eq.s32.totalorder %s88, 0
    %s91 = sadd.s32 %s90, 1
    %s92 = scalar_select %p89, %s90, %s91
    %p95 = pneg %p89
    %p96 = scmp.eq.s32.totalorder %s26, 5
    %p97 = por %p95, %p96
    %p98 = scmp.ne.s32.totalorder %s90, %s93
    %p99 = scmp.eq.s32.totalorder %s26, 0
    %p100 = por %p98, %p99
    %p101 = scmp.ne.s32.totalorder %s90, %s93
    %p102 = scmp.eq.s32.totalorder %s31, 5
    %p103 = por %p101, %p102
    %p104 = scmp.ne.s32.totalorder %s93, %s94
    %p105 = scmp.eq.s32.totalorder %s31, 0
    %p106 = por %p104, %p105
    %p107 = scmp.ne.s32.totalorder %s93, %s94
    %p108 = scmp.eq.s32.totalorder %s32, 5
    %p109 = por %p107, %p108
    %p111 = scmp.ne.s32.totalorder %s94, %s110
    %p112 = scmp.eq.s32.totalorder %s32, 0
    %p113 = por %p111, %p112
    %s114 = sld [smem:[#allocation3 + %s26]]
    %s115 = sld [smem:[#allocation3 + %s33]]
    %s116 = ssub.s32 %s114, %s115
    %p117 = scmp.eq.s32.totalorder %s116, 0
    %s119 = sadd.s32 %s118, 1
    %s120 = scalar_select %p117, %s118, %s119
    %p123 = pneg %p117
    %p124 = scmp.eq.s32.totalorder %s26, 5
    %p125 = por %p123, %p124
    %p126 = scmp.ne.s32.totalorder %s118, %s121
    %p127 = scmp.eq.s32.totalorder %s26, 0
    %p128 = por %p126, %p127
    %p129 = scmp.ne.s32.totalorder %s118, %s121
    %p130 = scmp.eq.s32.totalorder %s31, 5
    %p131 = por %p129, %p130
    %p132 = scmp.ne.s32.totalorder %s121, %s122
    %p133 = scmp.eq.s32.totalorder %s31, 0
    %p134 = por %p132, %p133
    %p135 = scmp.ne.s32.totalorder %s121, %s122
    %p136 = scmp.eq.s32.totalorder %s32, 5
    %p137 = por %p135, %p136
    %p139 = scmp.ne.s32.totalorder %s122, %s138
    %p140 = scmp.eq.s32.totalorder %s32, 0
    %p141 = por %p139, %p140
    %s142 = sld [smem:[#allocation3 + %s26]]
    %s143 = sld [smem:[#allocation3 + %s33]]
    %s144 = ssub.s32 %s142, %s143
    %p145 = scmp.eq.s32.totalorder %s144, 0
    %s147 = sadd.s32 %s146, 1
    %s148 = scalar_select %p145, %s146, %s147
    %p151 = pneg %p145
    %p152 = scmp.eq.s32.totalorder %s26, 5
    %p153 = por %p151, %p152
    %p154 = scmp.ne.s32.totalorder %s146, %s149
    %p155 = scmp.eq.s32.totalorder %s26, 0
    %p156 = por %p154, %p155
    %p157 = scmp.ne.s32.totalorder %s146, %s149
    %p158 = scmp.eq.s32.totalorder %s31, 5
    %p159 = por %p157, %p158
    %p160 = scmp.ne.s32.totalorder %s149, %s150
    %p161 = scmp.eq.s32.totalorder %s31, 0
    %p162 = por %p160, %p161
    %p163 = scmp.ne.s32.totalorder %s149, %s150
    %p164 = scmp.eq.s32.totalorder %s32, 5
    %p165 = por %p163, %p164
    %p167 = scmp.ne.s32.totalorder %s150, %s166
    %p168 = scmp.eq.s32.totalorder %s32, 0
    %p169 = por %p167, %p168
    %s170 = ssub.s32 %s26, %s33
    %p171 = scmp.eq.s32.totalorder %s170, 0
    %s173 = sadd.s32 %s172, 1
    %s174 = scalar_select %p171, %s172, %s173
    %p177 = pneg %p171
    %p178 = scmp.eq.s32.totalorder %s26, 5
    %p179 = por %p177, %p178
    %p180 = scmp.ne.s32.totalorder %s172, %s175
    %p181 = scmp.eq.s32.totalorder %s26, 0
    %p182 = por %p180, %p181
    %p183 = scmp.ne.s32.totalorder %s172, %s175
    %p184 = scmp.eq.s32.totalorder %s31, 5
    %p185 = por %p183, %p184
    %p186 = scmp.ne.s32.totalorder %s175, %s176
    %p187 = scmp.eq.s32.totalorder %s31, 0
    %p188 = por %p186, %p187
    %p189 = scmp.ne.s32.totalorder %s175, %s176
    %p190 = scmp.eq.s32.totalorder %s32, 5
    %p191 = por %p189, %p190
    %p193 = scmp.ne.s32.totalorder %s176, %s192
    %p194 = scmp.eq.s32.totalorder %s32, 0
    %p195 = por %p193, %p194
    %p196 = scmp.le.s32.totalorder 1, %s26
    %p197 = scmp.lt.s32.totalorder %s26, 7
    %p198 = pnand %p196, %p197
    %p199 = pneg %p198
    // Predicated region
    $region9: #{moe_forward.2} parent=5 // pred_check
      _
    $region10: #{moe_forward.2} parent=5 // pred_check_branch
      %201 = sbr.rel (%p198) target = $region12
    $region11: #{moe_forward.2} parent=5 // pred_region
      %s202 = ssub.s32 %s26, 1
    $region12: #{moe_forward.2} parent=5 // pred_fallthru
      _
    %p203 = scmp.lt.s32.totalorder %s26, 6
    // Predicated region
    $region13: #{moe_forward.2} parent=5 // pred_check
      %p204 = pneg %p203
    $region14: #{moe_forward.2} parent=5 // pred_check_branch
      %206 = sbr.rel (%p204) target = $region16
    $region15: #{moe_forward.2} parent=5 // pred_region
      // Predicated region
      $region17: #{moe_forward.2} parent=15 // pred_check
        %p207 = pneg %p46
      $region18: #{moe_forward.2} parent=15 // pred_check_branch
        %209 = sbr.rel (%p207) target = $region20
      $region19: #{moe_forward.2} parent=15 // pred_region
        %s210 = smul.u32 2, %s26
        %p211 = scmp.lt.s32.totalorder %s210, 11
        %s212 = scalar_select %p211, %s210, 11
        %s213 = smul.addr %s212, 8
        %s214 = scalar_lea.vmem %s2, %s213
        %s215 = smul.u32 2, %s26
      $region20: #{moe_forward.2} parent=15 // pred_fallthru
        _
      // Predicated region
      $region21: #{moe_forward.2} parent=15 // pred_check
        %p216 = pneg %p72
      $region22: #{moe_forward.2} parent=15 // pred_check_branch
        %218 = sbr.rel (%p216) target = $region24
      $region23: #{moe_forward.2} parent=15 // pred_region
        %s219 = smul.u32 2, %s26
        %p220 = scmp.lt.s32.totalorder %s219, 11
        %s221 = scalar_select %p220, %s219, 11
        %s222 = smul.addr %s221, 4
        %s223 = scalar_lea.vmem %s3, %s222
        %s224 = smul.u32 2, %s26
      $region24: #{moe_forward.2} parent=15 // pred_fallthru
        _
      // Predicated region
      $region25: #{moe_forward.2} parent=15 // pred_check
        %p225 = pneg %p100
      $region26: #{moe_forward.2} parent=15 // pred_check_branch
        %227 = sbr.rel (%p225) target = $region28
      $region27: #{moe_forward.2} parent=15 // pred_region
        %s228 = sld [smem:[#allocation3 + %s26]]
        %p229 = scmp.lt.s32.totalorder %s228, 3
        %s230 = scalar_select %p229, %s228, 3
        %s231 = smul.addr %s230, 4
        %s232 = smul.addr %s231, 4
        %s233 = scalar_lea.vmem %s4, %s232
        %s234 = sld [smem:[#allocation3 + %s26]]
      $region28: #{moe_forward.2} parent=15 // pred_fallthru
        _
      // Predicated region
      $region29: #{moe_forward.2} parent=15 // pred_check
        %p235 = pneg %p128
      $region30: #{moe_forward.2} parent=15 // pred_check_branch
        %237 = sbr.rel (%p235) target = $region32
      $region31: #{moe_forward.2} parent=15 // pred_region
        %s238 = sld [smem:[#allocation3 + %s26]]
        %p239 = scmp.lt.s32.totalorder %s238, 3
        %s240 = scalar_select %p239, %s238, 3
        %s241 = smul.addr %s240, 4
        %s242 = smul.addr %s241, 4
        %s243 = scalar_lea.vmem %s5, %s242
        %s244 = sld [smem:[#allocation3 + %s26]]
      $region32: #{moe_forward.2} parent=15 // pred_fallthru
        _
      // Predicated region
      $region33: #{moe_forward.2} parent=15 // pred_check
        %p245 = pneg %p156
      $region34: #{moe_forward.2} parent=15 // pred_check_branch
        %247 = sbr.rel (%p245) target = $region36
      $region35: #{moe_forward.2} parent=15 // pred_region
        %s248 = sld [smem:[#allocation3 + %s26]]
        %p249 = scmp.lt.s32.totalorder %s248, 3
        %s250 = scalar_select %p249, %s248, 3
        %s251 = smul.addr %s250, 8
        %s252 = smul.addr %s251, 4
        %s253 = scalar_lea.vmem %s6, %s252
        %s254 = sld [smem:[#allocation3 + %s26]]
      $region36: #{moe_forward.2} parent=15 // pred_fallthru
        _
    $region16: #{moe_forward.2} parent=5 // pred_fallthru
      _
    %p255 = scmp.le.s32.totalorder 1, %s26
    %p256 = scmp.lt.s32.totalorder %s26, 7
    %p257 = pnand %p255, %p256
    %p258 = pneg %p257
    // Predicated region
    $region37: #{moe_forward.2} parent=5 // pred_check
      _
    $region38: #{moe_forward.2} parent=5 // pred_check_branch
      %260 = sbr.rel (%p257) target = $region40
    $region39: #{moe_forward.2} parent=5 // pred_region
      %s261 = ssub.s32 %s26, 1
      %s262 = smul.u32 2, %s31
      %p263 = scmp.lt.s32.totalorder %s262, 11
      %s264 = scalar_select %p263, %s262, 11
      %s265 = smul.addr %s264, 8
      %s266 = scalar_lea.vmem %s2, %s265
      %p267 = pneg %p52
      %p268 = pneg %p49
      %s269 = smul.u32 2, %s31
      %p270 = scmp.lt.s32.totalorder %s269, 11
      %s271 = scalar_select %p270, %s269, 11
      %s272 = smul.addr %s271, 4
      %s273 = scalar_lea.vmem %s3, %s272
      %p274 = pneg %p78
      %p275 = pneg %p75
      %s276 = sld [smem:[#allocation3 + %s31]]
      %p277 = scmp.lt.s32.totalorder %s276, 3
      %s278 = scalar_select %p277, %s276, 3
      %s279 = smul.addr %s278, 4
      %s280 = smul.addr %s279, 4
      %s281 = scalar_lea.vmem %s4, %s280
      %p282 = pneg %p106
      %p283 = pneg %p103
      %s284 = sld [smem:[#allocation3 + %s31]]
      %p285 = scmp.lt.s32.totalorder %s284, 3
      %s286 = scalar_select %p285, %s284, 3
      %s287 = smul.addr %s286, 4
      %s288 = smul.addr %s287, 4
      %s289 = scalar_lea.vmem %s5, %s288
      %p290 = pneg %p134
      %p291 = pneg %p131
      %s292 = sld [smem:[#allocation3 + %s31]]
      %p293 = scmp.lt.s32.totalorder %s292, 3
      %s294 = scalar_select %p293, %s292, 3
      %s295 = smul.addr %s294, 8
      %s296 = smul.addr %s295, 4
      %s297 = scalar_lea.vmem %s6, %s296
      %p298 = pneg %p162
      %p299 = pneg %p159
      %p300 = pneg %p188
      %p301 = pneg %p185
      %s302 = smul.u32 2, %s31
      %p303 = scmp.lt.s32.totalorder %s302, 11
      %s304 = scalar_select %p303, %s302, 11
      %s305 = smul.addr %s304, 4
      %s306 = scalar_lea.vmem %s7, %s305
      %s307 = smul.u32 2, %s31
      %p308 = scmp.lt.s32.totalorder %s307, 11
      %s309 = scalar_select %p308, %s307, 11
      %s310 = smul.addr %s309, 8
      %s311 = scalar_lea.vmem %s2, %s310
      %s312 = smul.u32 2, %s31
      %s313 = smul.u32 2, %s31
      %p314 = scmp.lt.s32.totalorder %s313, 11
      %s315 = scalar_select %p314, %s313, 11
      %s316 = smul.addr %s315, 4
      %s317 = scalar_lea.vmem %s3, %s316
      %s318 = smul.u32 2, %s31
      %s319 = sld [smem:[#allocation3 + %s31]]
      %p320 = scmp.lt.s32.totalorder %s319, 3
      %s321 = scalar_select %p320, %s319, 3
      %s322 = smul.addr %s321, 4
      %s323 = smul.addr %s322, 4
      %s324 = scalar_lea.vmem %s4, %s323
      %s325 = sld [smem:[#allocation3 + %s31]]
      %s326 = sld [smem:[#allocation3 + %s31]]
      %p327 = scmp.lt.s32.totalorder %s326, 3
      %s328 = scalar_select %p327, %s326, 3
      %s329 = smul.addr %s328, 4
      %s330 = smul.addr %s329, 4
      %s331 = scalar_lea.vmem %s5, %s330
      %s332 = sld [smem:[#allocation3 + %s31]]
      %s333 = sld [smem:[#allocation3 + %s31]]
      %p334 = scmp.lt.s32.totalorder %s333, 3
      %s335 = scalar_select %p334, %s333, 3
      %s336 = smul.addr %s335, 8
      %s337 = smul.addr %s336, 4
      %s338 = scalar_lea.vmem %s6, %s337
      %s339 = sld [smem:[#allocation3 + %s31]]
      %s340 = smul.u32 2, %s31
      %p341 = scmp.lt.s32.totalorder %s340, 11
      %s342 = scalar_select %p341, %s340, 11
      %s343 = smul.addr %s342, 4
      %s344 = scalar_lea.vmem %s7, %s343
      %s345 = smul.u32 2, %s31
      %s347 = sld [smem:[#allocation4 + %s31]]
      %p348 = scmp.ne.s32.totalorder %s347, 0
      // Predicated region
      $region41: #{moe_forward.2} parent=39 // pred_check
        %p349 = pneg %p348
      $region42: #{moe_forward.2} parent=39 // pred_check_branch
        %351 = sbr.rel (%p349) target = $region44
      $region43: #{moe_forward.2} parent=39 // pred_region
        %v352 = vld [vmem:[%s317] sm:$0xf]
        %v353 = vld [vmem:[%s317 + $0x4] sm:$0xf]
        %v354 = vld [vmem:[%s324] sm:$0xf]
        %v355 = vld [vmem:[%s324 + $0x4] sm:$0xf]
        %v356 = vld [vmem:[%s324 + $0x8] sm:$0xf]
        %v357 = vld [vmem:[%s324 + $0xc] sm:$0xf]
        %v360 = vunpack.c.l.b16 %v352
        %v361 = vunpack.c.l.b16 %v353
        %v362 = vpack.c.b16 %v361, %v360
        %v367 = vunpack.c.l.b16 %v354
        %v368 = vunpack.c.l.b16 %v355
        %v369 = vunpack.c.l.b16 %v356
        %v370 = vunpack.c.l.b16 %v357
        %v371 = vpack.c.b16 %v368, %v367
        %v372 = vpack.c.b16 %v370, %v369
        %vm375 = vcmask 261120
        %v377 = vsel %vm375, %v362, 0
        %379 = vmatpush.bf16.msra.mxu0 0
        %380 = vmatpush.bf16.msra.mxu0 0
        %381 = vmatpush.bf16.msra.mxu0 0
        %382 = vmatpush.bf16.msra.mxu0 0
        %383 = vmatpush.bf16.msra.mxu0 0
        %384 = vmatpush.bf16.msra.mxu0 0
        %385 = vmatpush.bf16.msra.mxu0 %v372
        %386 = vmatpush.bf16.msra.mxu0 %v371
        %387 = vmatmul.bf16.gmra.mxu0 %v377
        %v388 = vpop.f32.mrf.mxu0
        %v389 = vadd.f32 0.0, %v388
        %v390 = vpop.f32.mrf.mxu0
        %v391 = vadd.f32 0.0, %v390
        %392 = vdwg.mxu0
        %v393 = vld [vmem:[%s331] sm:$0xf]
        %v394 = vld [vmem:[%s331 + $0x4] sm:$0xf]
        %v395 = vld [vmem:[%s331 + $0x8] sm:$0xf]
        %v396 = vld [vmem:[%s331 + $0xc] sm:$0xf]
        %v401 = vunpack.c.l.b16 %v393
        %v402 = vunpack.c.l.b16 %v394
        %v403 = vunpack.c.l.b16 %v395
        %v404 = vunpack.c.l.b16 %v396
        %v405 = vpack.c.b16 %v402, %v401
        %v406 = vpack.c.b16 %v404, %v403
        %409 = vmatpush.bf16.msra.mxu0 0
        %410 = vmatpush.bf16.msra.mxu0 0
        %411 = vmatpush.bf16.msra.mxu0 0
        %412 = vmatpush.bf16.msra.mxu0 0
        %413 = vmatpush.bf16.msra.mxu0 0
        %414 = vmatpush.bf16.msra.mxu0 0
        %415 = vmatpush.bf16.msra.mxu0 %v406
        %416 = vmatpush.bf16.msra.mxu0 %v405
        %417 = vmatmul.bf16.gmra.mxu0 %v377
        %v418 = vpop.f32.mrf.mxu0
        %v419 = vadd.f32 0.0, %v418
        %v420 = vpop.f32.mrf.mxu0
        %v421 = vadd.f32 0.0, %v420
        %422 = vdwg.mxu0
        %v423 = vxor.u32 %v389, 2147483648
        %v424 = vxor.u32 %v391, 2147483648
        %v425 = vmul.f32 %v423, 1.442695
        %v426 = vpow.pop %v425
        %v427 = vmul.f32 %v424, 1.442695
        %v428 = vpow.pop %v427
        %v429 = vadd.f32 %v426, 1.0
        %v430 = vadd.f32 %v428, 1.0
        %v431 = vrcp.pop %v429
        %v432 = vmul.f32 %v429, %v431
        %v433 = vsub.f32 1.0, %v432
        %v434 = vmul.f32 %v431, %v433
        %v435 = vadd.f32 %v431, %v434
        %vm436 = vweird.f32 %v429
        %vm437 = vweird.f32 %v431
        %vm438 = vmor %vm436, %vm437
        %v439 = vsel %vm438, %v431, %v435
        %v440 = vand.u32 2147483647, %v429
        %vm441 = vcmp.eq.f32.partialorder %v440, 8.507059e+37
        %v442 = vand.u32 %v429, 2147483648
        %v443 = vor.u32 1.1754944e-38, %v442
        %v444 = vsel %vm441, %v443, %v439
        %v445 = vmul.f32 1.0, %v444
        %v446 = vrcp.pop %v430
        %v447 = vmul.f32 %v430, %v446
        %v448 = vsub.f32 1.0, %v447
        %v449 = vmul.f32 %v446, %v448
        %v450 = vadd.f32 %v446, %v449
        %vm451 = vweird.f32 %v430
        %vm452 = vweird.f32 %v446
        %vm453 = vmor %vm451, %vm452
        %v454 = vsel %vm453, %v446, %v450
        %v455 = vand.u32 2147483647, %v430
        %vm456 = vcmp.eq.f32.partialorder %v455, 8.507059e+37
        %v457 = vand.u32 %v430, 2147483648
        %v458 = vor.u32 1.1754944e-38, %v457
        %v459 = vsel %vm456, %v458, %v454
        %v460 = vmul.f32 1.0, %v459
        %v461 = vmul.f32 %v389, %v445
        %v462 = vmul.f32 %v391, %v460
        %v463 = vmul.f32 %v461, %v419
        %v464 = vmul.f32 %v462, %v421
        %v465 = vpack.c.bf16 %v464, %v463
        %v466 = vld [vmem:[%s338] sm:$0xf]
        %v467 = vld [vmem:[%s338 + $0x4] sm:$0xf]
        %v468 = vld [vmem:[%s338 + $0x8] sm:$0xf]
        %v469 = vld [vmem:[%s338 + $0xc] sm:$0xf]
        %v470 = vld [vmem:[%s338 + $0x10] sm:$0xf]
        %v471 = vld [vmem:[%s338 + $0x14] sm:$0xf]
        %v472 = vld [vmem:[%s338 + $0x18] sm:$0xf]
        %v473 = vld [vmem:[%s338 + $0x1c] sm:$0xf]
        %v482 = vunpack.c.l.b16 %v466
        %v483 = vunpack.c.l.b16 %v467
        %v484 = vunpack.c.l.b16 %v468
        %v485 = vunpack.c.l.b16 %v469
        %v486 = vunpack.c.l.b16 %v470
        %v487 = vunpack.c.l.b16 %v471
        %v488 = vunpack.c.l.b16 %v472
        %v489 = vunpack.c.l.b16 %v473
        %v490 = vpack.c.b16 %v483, %v482
        %v491 = vpack.c.b16 %v485, %v484
        %v492 = vpack.c.b16 %v487, %v486
        %v493 = vpack.c.b16 %v489, %v488
        %vm498 = vcmask 523264
        %v500 = vsel %vm498, %v465, 0
        %502 = vmatpush.bf16.msra.mxu0 0
        %503 = vmatpush.bf16.msra.mxu0 0
        %504 = vmatpush.bf16.msra.mxu0 0
        %505 = vmatpush.bf16.msra.mxu0 0
        %506 = vmatpush.bf16.msra.mxu0 %v493
        %507 = vmatpush.bf16.msra.mxu0 %v492
        %508 = vmatpush.bf16.msra.mxu0 %v491
        %509 = vmatpush.bf16.msra.mxu0 %v490
        %510 = vmatmul.bf16.gmra.mxu0 %v500
        %v511 = vpop.f32.mrf.mxu0
        %v512 = vadd.f32 0.0, %v511
        %v513 = vpop.f32.mrf.mxu0
        %v514 = vadd.f32 0.0, %v513
        %515 = vdwg.mxu0
        %v516 = vld [vmem:[%s311] sm:$0xff]
        %v517 = vld [vmem:[%s311 + $0x8] sm:$0xff]
        %519 = vset.pattern.permute.xlu0 0
        %520 = vperm.xlu0 %519, %v516
        %v521 = vpop.permute.xlu0 %520
        %524 = vset.pattern.permute.xlu0 0
        %525 = vperm.xlu0 %524, %v517
        %v526 = vpop.permute.xlu0 %525
        %v528 = vmul.f32 %v521, %v512
        %v529 = vmul.f32 %v526, %v514
        %v530 = vpack.c.bf16 %v528, %v528
        %v531 = vpack.c.bf16 %v529, %v529
        %vm532 = vcmask 257024
        %533 = vst.msk [vmem:[%s344] sm:$0xf] %vm532, %v530
        %534 = vst.msk [vmem:[%s344 + $0x4] sm:$0xf] %vm532, %v531
      $region44: #{moe_forward.2} parent=39 // pred_fallthru
        _
      %s535 = sld [smem:[#allocation4 + %s31]]
      %p536 = scmp.eq.s32.totalorder %s535, 0
      // Predicated region
      $region45: #{moe_forward.2} parent=39 // pred_check
        %p537 = pneg %p536
      $region46: #{moe_forward.2} parent=39 // pred_check_branch
        %539 = sbr.rel (%p537) target = $region48
      $region47: #{moe_forward.2} parent=39 // pred_region
        %vm540 = vcmask 257024
        %541 = vst.msk [vmem:[%s344] sm:$0xf] %vm540, 0
        %542 = vst.msk [vmem:[%s344 + $0x4] sm:$0xf] %vm540, 0
      $region48: #{moe_forward.2} parent=39 // pred_fallthru
        _
      %s543 = smul.u32 2, %s31
      %p544 = scmp.lt.s32.totalorder %s543, 11
      %s545 = scalar_select %p544, %s543, 11
      %s546 = smul.addr %s545, 4
      %s547 = scalar_lea.vmem %s7, %s546
      // Predicated region
      $region49: #{moe_forward.2} parent=39 // pred_check
        %p548 = pneg %p185
      $region50: #{moe_forward.2} parent=39 // pred_check_branch
        %550 = sbr.rel (%p548) target = $region52
      $region51: #{moe_forward.2} parent=39 // pred_region
        %s551 = smul.u32 2, %s31
      $region52: #{moe_forward.2} parent=39 // pred_fallthru
        _
    $region40: #{moe_forward.2} parent=5 // pred_fallthru
      _
    %p552 = scmp.le.s32.totalorder 2, %s26
    // Predicated region
    $region53: #{moe_forward.2} parent=5 // pred_check
      %p553 = pneg %p552
    $region54: #{moe_forward.2} parent=5 // pred_check_branch
      %555 = sbr.rel (%p553) target = $region56
    $region55: #{moe_forward.2} parent=5 // pred_region
      %s556 = ssub.s32 %s26, 2
      // Predicated region
      $region57: #{moe_forward.2} parent=55 // pred_check
        %p557 = pneg %p191
      $region58: #{moe_forward.2} parent=55 // pred_check_branch
        %559 = sbr.rel (%p557) target = $region60
      $region59: #{moe_forward.2} parent=55 // pred_region
        %s560 = smul.u32 2, %s32
        %p561 = scmp.lt.s32.totalorder %s560, 11
        %s562 = scalar_select %p561, %s560, 11
        %s563 = smul.addr %s562, 4
        %s564 = scalar_lea.vmem %s7, %s563
      $region60: #{moe_forward.2} parent=55 // pred_fallthru
        _
    $region56: #{moe_forward.2} parent=5 // pred_fallthru
      _
  $region6: #{moe_forward.2} parent=0 // loop_footer
    %s30 = sadd.s32 1, %s26
  $region7: #{moe_forward.2} parent=0 // loop_footer_branch
    %25 = sbr.rel target = $region3
  $region8: #{moe_forward.2} parent=0 // loop_exit
    _

// kernel: moe_forward.3
$region0: #{moe_forward.3}
  #allocation0 [shape = 'u32[]', space=smem, size = 0x4, offset = 0x4, fixed_abs, tag = 'smem constant byte address 0x4 - core index']
  #allocation1 [shape = 'u32[72,128]{1,0:T(1,128)}', space=vmem, size = 0x9000, scoped, tag = 'internal scratch']
  %s0 = inlined_call_operand.vmem [shape: bf16[16,32], index: 0, kind: input, shape index: {}]
  %s1 = inlined_call_operand.vmem [shape: bf16[32,64], index: 1, kind: input, shape index: {}]
  %s2 = inlined_call_operand.vmem [shape: bf16[32,64], index: 2, kind: input, shape index: {}]
  %s3 = inlined_call_operand.vmem [shape: bf16[64,32], index: 3, kind: input, shape index: {}]
  %s4 = inlined_call_operand.vmem [shape: f32[16,1], index: 4, kind: input, shape index: {}]
  %s5 = inlined_call_operand.vmem [shape: bf16[16,32], index: 5, kind: input, shape index: {}]
  %s6 = inlined_call_operand.hbm [shape: f32[16,32], index: 6, kind: output, shape index: {}]
  %s7 = sld [smem:[#allocation0]]
  $region34: #{moe_forward.3} parent=0
    _
  %s9 = ssub.s32 1, %s7
  %s10 = scalar_select 0, %s9, %s7
  $region1: #{moe_forward.3} parent=0
    #allocation2 [shape = 'u8[8192]{0}', space=vmem, size = 0x2000, scoped, tag = 'output window, operand 0, single buffered']
    #allocation3 [shape = 's32[1]{0}', space=sflag, size = 0x4, scoped, tag = 'scoped memory for moe_forward.3']
    %11 = vsyncpa [#allocation3], 0
    // Predicated region
    $region2: #{moe_forward.3} parent=1 // pred_check
      _
    $region3: #{moe_forward.3} parent=1 // pred_check_branch
      %13 = sbr.rel (0) target = $region5
    $region4: #{moe_forward.3} parent=1 // pred_region
      _
    $region5: #{moe_forward.3} parent=1 // pred_fallthru
      _
    // Predicated region
    $region6: #{moe_forward.3} parent=1 // pred_check
      _
    $region7: #{moe_forward.3} parent=1 // pred_check_branch
      %15 = sbr.rel (0) target = $region9
    $region8: #{moe_forward.3} parent=1 // pred_region
      _
    $region9: #{moe_forward.3} parent=1 // pred_fallthru
      _
    // Predicated region
    $region10: #{moe_forward.3} parent=1 // pred_check
      _
    $region11: #{moe_forward.3} parent=1 // pred_check_branch
      %17 = sbr.rel (0) target = $region13
    $region12: #{moe_forward.3} parent=1 // pred_region
      _
    $region13: #{moe_forward.3} parent=1 // pred_fallthru
      _
    // Predicated region
    $region14: #{moe_forward.3} parent=1 // pred_check
      _
    $region15: #{moe_forward.3} parent=1 // pred_check_branch
      %19 = sbr.rel (0) target = $region17
    $region16: #{moe_forward.3} parent=1 // pred_region
      _
    $region17: #{moe_forward.3} parent=1 // pred_fallthru
      _
    // Predicated region
    $region18: #{moe_forward.3} parent=1 // pred_check
      _
    $region19: #{moe_forward.3} parent=1 // pred_check_branch
      %21 = sbr.rel (0) target = $region21
    $region20: #{moe_forward.3} parent=1 // pred_region
      _
    $region21: #{moe_forward.3} parent=1 // pred_fallthru
      _
    // Predicated region
    $region22: #{moe_forward.3} parent=1 // pred_check
      _
    $region23: #{moe_forward.3} parent=1 // pred_check_branch
      %23 = sbr.rel (0) target = $region25
    $region24: #{moe_forward.3} parent=1 // pred_region
      _
    $region25: #{moe_forward.3} parent=1 // pred_fallthru
      _
    %v25 = vld [vmem:[%s0] sm:$0xf]
    %v26 = vld [vmem:[%s0 + $0x4] sm:$0xf]
    %v27 = vld [vmem:[%s1] sm:$0xf]
    %v28 = vld [vmem:[%s1 + $0x4] sm:$0xf]
    %v29 = vld [vmem:[%s1 + $0x8] sm:$0xf]
    %v30 = vld [vmem:[%s1 + $0xc] sm:$0xf]
    %v33 = vunpack.c.l.b16 %v25
    %v34 = vunpack.c.l.b16 %v26
    %v35 = vpack.c.b16 %v34, %v33
    %v40 = vunpack.c.l.b16 %v27
    %v41 = vunpack.c.l.b16 %v28
    %v42 = vunpack.c.l.b16 %v29
    %v43 = vunpack.c.l.b16 %v30
    %v44 = vpack.c.b16 %v41, %v40
    %v45 = vpack.c.b16 %v43, %v42
    %vm48 = vcmask 261120
    %v50 = vsel %vm48, %v35, 0
    %52 = vmatpush.bf16.msra.mxu0 0
    %53 = vmatpush.bf16.msra.mxu0 0
    %54 = vmatpush.bf16.msra.mxu0 0
    %55 = vmatpush.bf16.msra.mxu0 0
    %56 = vmatpush.bf16.msra.mxu0 0
    %57 = vmatpush.bf16.msra.mxu0 0
    %58 = vmatpush.bf16.msra.mxu0 %v45
    %59 = vmatpush.bf16.msra.mxu0 %v44
    %60 = vmatmul.bf16.gmra.mxu0 %v50
    %v61 = vpop.f32.mrf.mxu0
    %v62 = vadd.f32 0.0, %v61
    %v63 = vpop.f32.mrf.mxu0
    %v64 = vadd.f32 0.0, %v63
    %65 = vdwg.mxu0
    %v66 = vld [vmem:[%s2] sm:$0xf]
    %v67 = vld [vmem:[%s2 + $0x4] sm:$0xf]
    %v68 = vld [vmem:[%s2 + $0x8] sm:$0xf]
    %v69 = vld [vmem:[%s2 + $0xc] sm:$0xf]
    %v74 = vunpack.c.l.b16 %v66
    %v75 = vunpack.c.l.b16 %v67
    %v76 = vunpack.c.l.b16 %v68
    %v77 = vunpack.c.l.b16 %v69
    %v78 = vpack.c.b16 %v75, %v74
    %v79 = vpack.c.b16 %v77, %v76
    %82 = vmatpush.bf16.msra.mxu0 0
    %83 = vmatpush.bf16.msra.mxu0 0
    %84 = vmatpush.bf16.msra.mxu0 0
    %85 = vmatpush.bf16.msra.mxu0 0
    %86 = vmatpush.bf16.msra.mxu0 0
    %87 = vmatpush.bf16.msra.mxu0 0
    %88 = vmatpush.bf16.msra.mxu0 %v79
    %89 = vmatpush.bf16.msra.mxu0 %v78
    %90 = vmatmul.bf16.gmra.mxu0 %v50
    %v91 = vpop.f32.mrf.mxu0
    %v92 = vadd.f32 0.0, %v91
    %v93 = vpop.f32.mrf.mxu0
    %v94 = vadd.f32 0.0, %v93
    %95 = vdwg.mxu0
    %v96 = vxor.u32 %v62, 2147483648
    %v97 = vxor.u32 %v64, 2147483648
    %v98 = vmul.f32 %v96, 1.442695
    %v99 = vpow.pop %v98
    %v100 = vmul.f32 %v97, 1.442695
    %v101 = vpow.pop %v100
    %v102 = vadd.f32 %v99, 1.0
    %v103 = vadd.f32 %v101, 1.0
    %v104 = vrcp.pop %v102
    %v105 = vmul.f32 %v102, %v104
    %v106 = vsub.f32 1.0, %v105
    %v107 = vmul.f32 %v104, %v106
    %v108 = vadd.f32 %v104, %v107
    %vm109 = vweird.f32 %v102
    %vm110 = vweird.f32 %v104
    %vm111 = vmor %vm109, %vm110
    %v112 = vsel %vm111, %v104, %v108
    %v113 = vand.u32 2147483647, %v102
    %vm114 = vcmp.eq.f32.partialorder %v113, 8.507059e+37
    %v115 = vand.u32 %v102, 2147483648
    %v116 = vor.u32 1.1754944e-38, %v115
    %v117 = vsel %vm114, %v116, %v112
    %v118 = vmul.f32 1.0, %v117
    %v119 = vrcp.pop %v103
    %v120 = vmul.f32 %v103, %v119
    %v121 = vsub.f32 1.0, %v120
    %v122 = vmul.f32 %v119, %v121
    %v123 = vadd.f32 %v119, %v122
    %vm124 = vweird.f32 %v103
    %vm125 = vweird.f32 %v119
    %vm126 = vmor %vm124, %vm125
    %v127 = vsel %vm126, %v119, %v123
    %v128 = vand.u32 2147483647, %v103
    %vm129 = vcmp.eq.f32.partialorder %v128, 8.507059e+37
    %v130 = vand.u32 %v103, 2147483648
    %v131 = vor.u32 1.1754944e-38, %v130
    %v132 = vsel %vm129, %v131, %v127
    %v133 = vmul.f32 1.0, %v132
    %v134 = vmul.f32 %v62, %v118
    %v135 = vmul.f32 %v64, %v133
    %v136 = vmul.f32 %v134, %v92
    %v137 = vmul.f32 %v135, %v94
    %v138 = vpack.c.bf16 %v137, %v136
    %v139 = vld [vmem:[%s3] sm:$0xf]
    %v140 = vld [vmem:[%s3 + $0x4] sm:$0xf]
    %v141 = vld [vmem:[%s3 + $0x8] sm:$0xf]
    %v142 = vld [vmem:[%s3 + $0xc] sm:$0xf]
    %v143 = vld [vmem:[%s3 + $0x10] sm:$0xf]
    %v144 = vld [vmem:[%s3 + $0x14] sm:$0xf]
    %v145 = vld [vmem:[%s3 + $0x18] sm:$0xf]
    %v146 = vld [vmem:[%s3 + $0x1c] sm:$0xf]
    %v155 = vunpack.c.l.b16 %v139
    %v156 = vunpack.c.l.b16 %v140
    %v157 = vunpack.c.l.b16 %v141
    %v158 = vunpack.c.l.b16 %v142
    %v159 = vunpack.c.l.b16 %v143
    %v160 = vunpack.c.l.b16 %v144
    %v161 = vunpack.c.l.b16 %v145
    %v162 = vunpack.c.l.b16 %v146
    %v163 = vpack.c.b16 %v156, %v155
    %v164 = vpack.c.b16 %v158, %v157
    %v165 = vpack.c.b16 %v160, %v159
    %v166 = vpack.c.b16 %v162, %v161
    %vm171 = vcmask 523264
    %v173 = vsel %vm171, %v138, 0
    %175 = vmatpush.bf16.msra.mxu0 0
    %176 = vmatpush.bf16.msra.mxu0 0
    %177 = vmatpush.bf16.msra.mxu0 0
    %178 = vmatpush.bf16.msra.mxu0 0
    %179 = vmatpush.bf16.msra.mxu0 %v166
    %180 = vmatpush.bf16.msra.mxu0 %v165
    %181 = vmatpush.bf16.msra.mxu0 %v164
    %182 = vmatpush.bf16.msra.mxu0 %v163
    %183 = vmatmul.bf16.gmra.mxu0 %v173
    %v184 = vpop.f32.mrf.mxu0
    %v185 = vadd.f32 0.0, %v184
    %v186 = vpop.f32.mrf.mxu0
    %v187 = vadd.f32 0.0, %v186
    %188 = vdwg.mxu0
    %v189 = vld [vmem:[%s4] sm:$0xff]
    %v190 = vld [vmem:[%s4 + $0x8] sm:$0xff]
    %v191 = vld [vmem:[%s5] sm:$0xf]
    %v192 = vld [vmem:[%s5 + $0x4] sm:$0xf]
    %v193 = vunpack.c.l.bf16 %v191
    %v194 = vunpack.c.l.bf16 %v192
    %196 = vset.pattern.permute.xlu0 0
    %197 = vperm.xlu0 %196, %v189
    %v198 = vpop.permute.xlu0 %197
    %201 = vset.pattern.permute.xlu0 0
    %202 = vperm.xlu0 %201, %v190
    %v203 = vpop.permute.xlu0 %202
    %v205 = vmul.f32 %v193, %v198
    %v206 = vmul.f32 %v194, %v203
    %v207 = vsub.f32 1.0, %v189
    %v208 = vsub.f32 1.0, %v190
    %210 = vset.pattern.permute.xlu0 0
    %211 = vperm.xlu0 %210, %v207
    %v212 = vpop.permute.xlu0 %211
    %215 = vset.pattern.permute.xlu0 0
    %216 = vperm.xlu0 %215, %v208
    %v217 = vpop.permute.xlu0 %216
    %v219 = vmul.f32 %v185, %v212
    %v220 = vmul.f32 %v187, %v217
    %v221 = vadd.f32 %v205, %v219
    %v222 = vadd.f32 %v206, %v220
    %223 = vst.msk [vmem:[#allocation2] sm:$0xff] %vm48, %v221
    %224 = vst.msk [vmem:[#allocation2 + $0x8] sm:$0xff] %vm48, %v222
    // Predicated region
    $region26: #{moe_forward.3} parent=1 // pred_check
      _
    $region27: #{moe_forward.3} parent=1 // pred_check_branch
      %226 = sbr.rel (0) target = $region29
    $region28: #{moe_forward.3} parent=1 // pred_region
      %228 = vsyncadd [#allocation3], 0
      %s229 = sshll.u32 [#allocation2], 4
      %s230 = int_to_ptr.vmem [resolvable:$true] %s229
      %s231 = sshll.u32 %s6, 4
      %s232 = int_to_ptr.hbm [resolvable:$true] %s231
      %237 = dma.vmem_to_hbm [thread:$0]  %s230, 256, %s232, [#allocation3], 128, 128, 8
    $region29: #{moe_forward.3} parent=1 // pred_fallthru
      _
    // Predicated region
    $region30: #{moe_forward.3} parent=1 // pred_check
      _
    $region31: #{moe_forward.3} parent=1 // pred_check_branch
      %239 = sbr.rel (0) target = $region33
    $region32: #{moe_forward.3} parent=1 // pred_region
      %241 = dma.done [#allocation3], 256
    $region33: #{moe_forward.3} parent=1 // pred_fallthru
      _
    %242 = vsyncpa [#allocation3], 1

</llo_original>
